<compile_context>
chip_gen: v6e
topology: v6e:2x2x1
jax: 0.10.0
libtpu: 0.0.40
codegen_flags: <defaults>
</compile_context>

<pallas_src>
import jax
import jax.numpy as jnp
from jax.experimental import pallas as pl
from jax.experimental.pallas import tpu as pltpu


def _concat_embedding_kernel(x_ref, pad_ref, o_ref):
    # x_ref: (tile_rows, input_size), pad_ref: (1, pad_size),
    # o_ref: (tile_rows, input_size + pad_size)
    tile_rows = o_ref.shape[0]
    input_size = x_ref.shape[-1]
    pad_size = pad_ref.shape[-1]
    # Two direct slice stores -- avoids a materialized concatenated temporary.
    o_ref[:, :input_size] = x_ref[...]
    o_ref[:, input_size:] = jnp.broadcast_to(pad_ref[...], (tile_rows, pad_size))


def concat_embedding(
    x: jax.Array,
    padding: jax.Array,
    *,
    tile_rows_cap: int = 8192,
    vmem_block_budget_bytes: int = 4 * 1024 * 1024,
) -> jax.Array:
    """x: (..., input_size); padding: (pad_size,) -> (..., input_size + pad_size)."""
    input_size = x.shape[-1]
    pad_size = padding.shape[-1]
    hidden_size = input_size + pad_size

    lead_shape = x.shape[:-1]
    rows = 1
    for d in lead_shape:
        rows *= d

    dtype = x.dtype
    itemsize = jnp.dtype(dtype).itemsize

    # Degenerate edge cases: no padding or no rows -> no kernel needed.
    if pad_size == 0:
        return x
    if rows == 0:
        return jnp.zeros((*lead_shape, hidden_size), dtype=dtype)

    x2d = x.reshape(rows, input_size)
    pad2d = padding.reshape(1, pad_size).astype(dtype)

    # Sublane packing multiple for this dtype: 8 (32-bit), 16 (16-bit), 32 (8-bit).
    sublane = 8 * max(1, 4 // itemsize)

    # Row tile from a VMEM budget (covers one in-block + one out-block; the pipeline
    # double-buffers, hence keep the budget well under the vmem_limit below).
    per_row_bytes = (input_size + hidden_size) * itemsize
    tile_rows = min(tile_rows_cap, max(sublane, vmem_block_budget_bytes // per_row_bytes))
    if tile_rows >= rows:
        tile_rows = rows  # full extent is always a legal block dim
    else:
        tile_rows = max(sublane, (tile_rows // sublane) * sublane)
    num_tiles = pl.cdiv(rows, tile_rows)

    bytes_accessed = (rows * input_size + pad_size + rows * hidden_size) * itemsize

    out = pl.pallas_call(
        _concat_embedding_kernel,
        out_shape=jax.ShapeDtypeStruct((rows, hidden_size), dtype),
        grid_spec=pltpu.PrefetchScalarGridSpec(
            num_scalar_prefetch=0,
            grid=(num_tiles,),
            in_specs=[
                pl.BlockSpec((tile_rows, input_size), lambda i: (i, 0)),
                # Constant index_map: tiny padding block stays resident across steps.
                pl.BlockSpec((1, pad_size), lambda i: (0, 0)),
            ],
            out_specs=pl.BlockSpec((tile_rows, hidden_size), lambda i: (i, 0)),
        ),
        compiler_params=pltpu.CompilerParams(
            # Row tiles are independent -> shard across TensorCores (megacore / v7x).
            dimension_semantics=("parallel",),
            # Safe on v5e/v6e (128 MiB) and v7x (64 MiB physical).
            vmem_limit_bytes=32 * 1024 * 1024,
        ),
        cost_estimate=pl.CostEstimate(
            flops=0, transcendentals=0, bytes_accessed=bytes_accessed
        ),
    )(x2d, pad2d)

    return out.reshape(*lead_shape, hidden_size)


if __name__ == "__main__":
    # Module hyperparameters (small shapes consistent with the forward).
    input_size = 4
    hidden_size = 32
    pad_size = hidden_size - input_size

    key = jax.random.PRNGKey(0)
    kx, kp, kx2, kx3 = jax.random.split(key, 4)

    # Deterministic parameter init (stands in for nn.Parameter(torch.randn(pad_size))).
    padding = jax.random.normal(kp, (pad_size,), dtype=jnp.float32)

    # Case 1: small (batch=2, seq=8) -- single-tile grid.
    batch, seq = 2, 8
    x = jax.random.normal(kx, (batch, seq, input_size), dtype=jnp.float32)
    z = jax.block_until_ready(concat_embedding(x, padding))
    ref = jnp.concatenate(
        [x, jnp.broadcast_to(padding, (batch, seq, pad_size))], axis=-1
    )
    assert z.shape == (batch, seq, hidden_size)
    assert jnp.allclose(z, ref), "mismatch vs reference (small case)"
    assert jnp.allclose(z[..., :input_size], x), "inverse(forward(x)) != x"

    # Case 2: multi-tile grid with a partial edge block (rows = 9*250 = 2250; cap=512
    # forces 5 grid steps, last one partial).
    b2, s2 = 9, 250
    x2 = jax.random.normal(kx2, (b2, s2, input_size), dtype=jnp.float32)
    z2 = jax.block_until_ready(concat_embedding(x2, padding, tile_rows_cap=512))
    ref2 = jnp.concatenate(
        [x2, jnp.broadcast_to(padding, (b2, s2, pad_size))], axis=-1
    )
    assert z2.shape == (b2, s2, hidden_size)
    assert jnp.allclose(z2, ref2), "mismatch vs reference (tiled case)"
    assert jnp.allclose(z2[..., :input_size], x2), "inverse(forward(x)) != x (tiled)"

    # Case 3: bf16 dtype path (16-bit sublane packing), default tile cap.
    x3 = jax.random.normal(kx3, (3, 40, input_size), dtype=jnp.bfloat16)
    z3 = jax.block_until_ready(concat_embedding(x3, padding))
    ref3 = jnp.concatenate(
        [x3, jnp.broadcast_to(padding.astype(jnp.bfloat16), (3, 40, pad_size))], axis=-1
    )
    assert z3.shape == (3, 40, hidden_size)
    assert jnp.array_equal(z3, ref3), "mismatch vs reference (bf16 case)"

    print("KERNEL_OK")
</pallas_src>

<mosaic_0001>
module attributes {stable_mosaic.version = 11 : i64} {
  func.func @_concat_embedding_kernel(%arg0: i32, %arg1: memref<16x4xf32, #tpu.memory_space<vmem>>, %arg2: memref<1x28xf32, #tpu.memory_space<vmem>>, %arg3: memref<16x32xf32, #tpu.memory_space<vmem>>) attributes {dimension_semantics = [#tpu.dimension_semantics<parallel>], iteration_bounds = array<i64: 1>, scalar_prefetch = 0 : i64, scratch_operands = 0 : i64, tpu.core_type = #tpu.core_type<tc>, window_params = [{transform_indices = @transform_0, window_bounds = array<i64: 16, 4>}, {pipeline_mode = #tpu.pipeline_mode<synchronous>, transform_indices = @transform_1, window_bounds = array<i64: 1, 28>}, {transform_indices = @transform_2, window_bounds = array<i64: 16, 32>}]} {
    %c0 = arith.constant 0 : index
    %c0_0 = arith.constant 0 : index
    %0 = vector.load %arg1[%c0, %c0_0] : memref<16x4xf32, #tpu.memory_space<vmem>>, vector<16x4xf32>
    %c0_1 = arith.constant 0 : index
    %c0_2 = arith.constant 0 : index
    %1 = vector.load %arg3[%c0_1, %c0_2] : memref<16x32xf32, #tpu.memory_space<vmem>>, vector<16x4xf32>
    tpu.vector_store %arg3[%c0_1, %c0_2], %0 {strides = array<i32>} : memref<16x32xf32, #tpu.memory_space<vmem>>, vector<16x4xf32>,
    %c0_3 = arith.constant 0 : index
    %c0_4 = arith.constant 0 : index
    %2 = vector.load %arg2[%c0_3, %c0_4] : memref<1x28xf32, #tpu.memory_space<vmem>>, vector<1x28xf32>
    %3 = vector.shape_cast %2 : vector<1x28xf32> to vector<1x28xf32>
    %4 = vector.broadcast %3 : vector<1x28xf32> to vector<16x28xf32>
    %c0_5 = arith.constant 0 : index
    %c4 = arith.constant 4 : index
    %5 = vector.load %arg3[%c0_5, %c4] : memref<16x32xf32, #tpu.memory_space<vmem>>, vector<16x28xf32>
    tpu.vector_store %arg3[%c0_5, %c4], %4 {strides = array<i32>} : memref<16x32xf32, #tpu.memory_space<vmem>>, vector<16x28xf32>,
    return
  }
  func.func @transform_0(%arg0: i32) -> (i32, i32) {
    %c0_i32 = arith.constant 0 : i32
    %c0_i32_0 = arith.constant 0 : i32
    return %arg0, %c0_i32 : i32, i32
  }
  func.func @transform_1(%arg0: i32) -> (i32, i32) {
    %c0_i32 = arith.constant 0 : i32
    %c0_i32_0 = arith.constant 0 : i32
    %c0_i32_1 = arith.constant 0 : i32
    return %c0_i32, %c0_i32_0 : i32, i32
  }
  func.func @transform_2(%arg0: i32) -> (i32, i32) {
    %c0_i32 = arith.constant 0 : i32
    %c0_i32_0 = arith.constant 0 : i32
    return %arg0, %c0_i32 : i32, i32
  }
}

</mosaic_0001>

<llo_original>
// kernel: tpu_custom_call.1
$region0: #{tpu_custom_call.1}
  #allocation0 [shape = 'u32[]', space=smem, size = 0x4, offset = 0x4, fixed_abs, tag = 'smem constant byte address 0x4 - core index']
  #allocation1 [shape = 'u32[144,128]{1,0:T(1,128)}', space=vmem, size = 0x12000, scoped, tag = 'internal scratch']
  %s0 = inlined_call_operand.vmem [shape: f32[16,4], index: 0, kind: input, shape index: {}]
  %s1 = inlined_call_operand.vmem [shape: f32[1,28], index: 1, kind: input, shape index: {}]
  %s2 = inlined_call_operand.hbm [shape: f32[16,32], index: 2, kind: output, shape index: {}]
  %s3 = sld [smem:[#allocation0]]
  $region18: #{tpu_custom_call.1} parent=0
    _
  %s5 = ssub.s32 1, %s3
  %s6 = scalar_select 0, %s5, %s3
  $region1: #{tpu_custom_call.1} parent=0
    #allocation2 [shape = 'u8[8192]{0}', space=vmem, size = 0x2000, scoped, tag = 'output window, operand 0, single buffered']
    #allocation3 [shape = 's32[1]{0}', space=sflag, size = 0x4, scoped, tag = 'scoped memory for tpu_custom_call.1']
    %7 = vsyncpa [#allocation3], 0
    // Predicated region
    $region2: #{tpu_custom_call.1} parent=1 // pred_check
      _
    $region3: #{tpu_custom_call.1} parent=1 // pred_check_branch
      %9 = sbr.rel (0) target = $region5
    $region4: #{tpu_custom_call.1} parent=1 // pred_region
      _
    $region5: #{tpu_custom_call.1} parent=1 // pred_fallthru
      _
    // Predicated region
    $region6: #{tpu_custom_call.1} parent=1 // pred_check
      _
    $region7: #{tpu_custom_call.1} parent=1 // pred_check_branch
      %11 = sbr.rel (0) target = $region9
    $region8: #{tpu_custom_call.1} parent=1 // pred_region
      _
    $region9: #{tpu_custom_call.1} parent=1 // pred_fallthru
      _
    %v12 = vld [vmem:[%s0] sm:$0xff]
    %v13 = vld [vmem:[%s0 + $0x8] sm:$0xff]
    %vm14 = vcmask 31744
    %15 = vst.msk [vmem:[#allocation2] sm:$0xff] %vm14, %v12
    %16 = vst.msk [vmem:[#allocation2 + $0x8] sm:$0xff] %vm14, %v13
    %v17 = vld [vmem:[%s1] sm:$0x1]
    %v19 = vlaneseq
    %v20 = vshrl.u32 %v19, 7
    %v21 = vsub.s32 0, %v20
    %v22 = vrot.slane %v17, %v21
    %23 = vrot.lane.b32.xlu0 %v22, 4
    %v24 = vpop.permute.xlu0 %23
    %vm26 = vcmask 261152
    %27 = vst.msk [vmem:[#allocation2] sm:$0xff] %vm26, %v24
    %28 = vst.msk [vmem:[#allocation2 + $0x8] sm:$0xff] %vm26, %v24
    // Predicated region
    $region10: #{tpu_custom_call.1} parent=1 // pred_check
      _
    $region11: #{tpu_custom_call.1} parent=1 // pred_check_branch
      %30 = sbr.rel (0) target = $region13
    $region12: #{tpu_custom_call.1} parent=1 // pred_region
      %s32 = ssub.s32 256, 256
      %33 = vsyncadd [#allocation3], %s32
      %s34 = sshll.u32 [#allocation2], 4
      %s35 = int_to_ptr.vmem [resolvable:$true] %s34
      %40 = dma.vmem_to_hbm [thread:$0]  %s35, 256, %s2, [#allocation3], 128, 128, 8
    $region13: #{tpu_custom_call.1} parent=1 // pred_fallthru
      _
    // Predicated region
    $region14: #{tpu_custom_call.1} parent=1 // pred_check
      _
    $region15: #{tpu_custom_call.1} parent=1 // pred_check_branch
      %42 = sbr.rel (0) target = $region17
    $region16: #{tpu_custom_call.1} parent=1 // pred_region
      %43 = dma.done [#allocation3], 256
    $region17: #{tpu_custom_call.1} parent=1 // pred_fallthru
      _
    %44 = vsyncpa [#allocation3], 1

</llo_original>
